<compile_context>
chip_gen: v7x
topology: tpu7x:2x2x1
jax: 0.10.0
libtpu: 0.0.40
codegen_flags: <defaults>
</compile_context>

<pallas_src>
import functools
import math

import jax
import jax.numpy as jnp
from jax.experimental import pallas as pl
from jax.experimental.pallas import tpu as pltpu

_LOG2 = math.log(2.0)


def _logcosh_kernel(x_ref, out_ref, acc_ref, *, n_gaze, n_hp, batch, block_b,
                    n_blocks, n_inner, needs_mask):
    """One (2*d, block_b) tile of the fused, weighted log-cosh reduction.

    x_ref  : (2*d, block_b) tile; rows [0, d) = gt, rows [d, 2*d) = pred.
    out_ref: (1, 8, 128) f32 per-chunk partial-sum output block.
    acc_ref: (d, block_b) f32 VMEM elementwise accumulator (per chunk).
    """
    d = n_gaze + n_hp
    o = pl.program_id(0)          # parallel chunk (v7x: one per TensorCore)
    j = pl.program_id(1)          # sequential step inside the chunk
    bi = o * n_inner + j          # global lane-block index

    @pl.when(j == 0)
    def _init():
        acc_ref[...] = jnp.zeros_like(acc_ref)

    x = x_ref[...].astype(jnp.float32)
    ax = jnp.abs(x[:d, :] - x[d:, :])
    # log(cosh(t)) == |t| + log(1 + exp(-2|t|)) - log(2)   (stable, no overflow)
    lc = ax + jnp.log(1.0 + jnp.exp(-2.0 * ax)) - _LOG2

    if needs_mask:
        # Full blocks accumulate unmasked; the (at most one) ragged block is
        # lane-masked; fully out-of-range overhang steps contribute nothing.
        @pl.when((bi + 1) * block_b <= batch)
        def _acc_full():
            acc_ref[...] += lc

        @pl.when(jnp.logical_and(bi < n_blocks, (bi + 1) * block_b > batch))
        def _acc_tail():
            col = bi * block_b + jax.lax.broadcasted_iota(jnp.int32, lc.shape, 1)
            acc_ref[...] += jnp.where(col < batch, lc, 0.0)
    else:
        acc_ref[...] += lc

    @pl.when(j == n_inner - 1)
    def _finalize():
        per_row = jnp.sum(acc_ref[...], axis=1, keepdims=True)      # (d, 1)
        row = jax.lax.broadcasted_iota(jnp.int32, per_row.shape, 0)
        w = jnp.where(row < n_gaze, jnp.float32(1.0), jnp.float32(0.2))
        partial = jnp.sum(per_row * w)
        out_ref[...] = jnp.broadcast_to(partial, out_ref.shape)


@functools.partial(jax.jit, static_argnames=("lane_tile", "num_chunks"))
def logcosh_loss(gaze_gt, hp_gt, gaze_pred, hp_pred, *,
                 lane_tile=65536, num_chunks=2):
    """Pallas implementation of LogCosh.forward; returns a scalar f32.

    mean over batch of:
        0.2 * sum(logcosh(hp_gt - hp_pred), axis=1)
            + sum(logcosh(gaze_gt - gaze_pred), axis=1)
    """
    B, Dg = gaze_gt.shape
    Bh, Dh = hp_gt.shape
    assert gaze_pred.shape == (B, Dg)
    assert hp_pred.shape == (Bh, Dh)
    assert Bh == B
    assert lane_tile % 128 == 0
    d = Dg + Dh

    # Single packed operand (2*d, B): rows [0, d) = gt, [d, 2*d) = pred; batch
    # on lanes.  Under jit the transposes + concat fuse into one producer.
    # Dtype is kept as-is; the kernel upcasts to f32 internally.
    x = jnp.concatenate([gaze_gt.T, hp_gt.T, gaze_pred.T, hp_pred.T], axis=0)

    if B <= lane_tile:
        block_b = B                      # whole batch in one block (full dim)
        n_blocks = 1
    else:
        block_b = lane_tile
        n_blocks = pl.cdiv(B, block_b)

    n_outer = max(1, min(num_chunks, n_blocks))   # parallel chunks (v7x: 2 TCs)
    n_inner = pl.cdiv(n_blocks, n_outer)
    needs_mask = (n_outer * n_inner * block_b) != B

    def in_index(o, j):
        bi = o * n_inner + j
        if n_outer * n_inner != n_blocks:
            bi = jnp.minimum(bi, n_blocks - 1)    # keep overhang DMAs in bounds
        return (0, bi)

    kernel = functools.partial(
        _logcosh_kernel, n_gaze=Dg, n_hp=Dh, batch=B, block_b=block_b,
        n_blocks=n_blocks, n_inner=n_inner, needs_mask=needs_mask)

    cost = pl.CostEstimate(
        flops=10 * d * B,
        transcendentals=2 * d * B,
        bytes_accessed=2 * d * B * x.dtype.itemsize + n_outer * 8 * 128 * 4)

    partials = pl.pallas_call(
        kernel,
        out_shape=jax.ShapeDtypeStruct((n_outer, 8, 128), jnp.float32),
        grid=(n_outer, n_inner),
        in_specs=[pl.BlockSpec((2 * d, block_b), in_index)],
        out_specs=pl.BlockSpec((1, 8, 128), lambda o, j: (o, 0, 0)),
        scratch_shapes=[pltpu.VMEM((d, block_b), jnp.float32)],
        compiler_params=pltpu.CompilerParams(
            dimension_semantics=("parallel", "arbitrary")),
        cost_estimate=cost,
    )(x)

    return jnp.sum(partials[:, 0, 0]) / B


def _reference(gaze_gt, hp_gt, gaze_pred, hp_pred):
    hp_l = jnp.sum(jnp.log(jnp.cosh(hp_gt - hp_pred)), axis=1)
    gz_l = jnp.sum(jnp.log(jnp.cosh(gaze_gt - gaze_pred)), axis=1)
    return jnp.mean(0.2 * hp_l + gz_l)


if __name__ == "__main__":
    key = jax.random.PRNGKey(0)

    # Small shapes consistent with the module: gaze / head-pose are (B, 2).
    B, D = 8, 2
    k1, k2, k3, k4 = jax.random.split(key, 4)
    gaze_gt = jax.random.normal(k1, (B, D), dtype=jnp.float32)
    hp_gt = jax.random.normal(k2, (B, D), dtype=jnp.float32)
    gaze_pred = jax.random.normal(k3, (B, D), dtype=jnp.float32)
    hp_pred = jax.random.normal(k4, (B, D), dtype=jnp.float32)

    loss = jax.block_until_ready(logcosh_loss(gaze_gt, hp_gt, gaze_pred, hp_pred))
    ref = _reference(gaze_gt, hp_gt, gaze_pred, hp_pred)
    assert jnp.allclose(loss, ref, rtol=1e-5, atol=1e-5), (loss, ref)

    # Multi-block grid + 2-way parallel split + ragged-tail mask + overhang skip.
    B2 = 300
    k5, k6, k7, k8 = jax.random.split(jax.random.PRNGKey(1), 4)
    gaze_gt2 = jax.random.normal(k5, (B2, D), dtype=jnp.float32)
    hp_gt2 = jax.random.normal(k6, (B2, D), dtype=jnp.float32)
    gaze_pred2 = jax.random.normal(k7, (B2, D), dtype=jnp.float32)
    hp_pred2 = jax.random.normal(k8, (B2, D), dtype=jnp.float32)
    ref2 = _reference(gaze_gt2, hp_gt2, gaze_pred2, hp_pred2)

    loss2 = jax.block_until_ready(
        logcosh_loss(gaze_gt2, hp_gt2, gaze_pred2, hp_pred2,
                     lane_tile=128, num_chunks=2))
    assert jnp.allclose(loss2, ref2, rtol=1e-5, atol=1e-5), (loss2, ref2)

    # Same data through the default single-block fast path.
    loss2b = jax.block_until_ready(
        logcosh_loss(gaze_gt2, hp_gt2, gaze_pred2, hp_pred2))
    assert jnp.allclose(loss2b, ref2, rtol=1e-5, atol=1e-5), (loss2b, ref2)

    # Evenly divisible multi-block path (no mask, clean 2-chunk split).
    B3 = 512
    k9, k10, k11, k12 = jax.random.split(jax.random.PRNGKey(2), 4)
    gaze_gt3 = jax.random.normal(k9, (B3, D), dtype=jnp.float32)
    hp_gt3 = jax.random.normal(k10, (B3, D), dtype=jnp.float32)
    gaze_pred3 = jax.random.normal(k11, (B3, D), dtype=jnp.float32)
    hp_pred3 = jax.random.normal(k12, (B3, D), dtype=jnp.float32)
    loss3 = jax.block_until_ready(
        logcosh_loss(gaze_gt3, hp_gt3, gaze_pred3, hp_pred3, lane_tile=128))
    ref3 = _reference(gaze_gt3, hp_gt3, gaze_pred3, hp_pred3)
    assert jnp.allclose(loss3, ref3, rtol=1e-5, atol=1e-5), (loss3, ref3)

    print("KERNEL_OK")
</pallas_src>

<mosaic_0001>
module attributes {stable_mosaic.version = 11 : i64} {
  func.func @_logcosh_kernel(%arg0: i32, %arg1: i32, %arg2: memref<8x8xf32, #tpu.memory_space<vmem>>, %arg3: memref<1x8x128xf32, #tpu.memory_space<vmem>>, %arg4: memref<4x8xf32, #tpu.memory_space<vmem>>) attributes {dimension_semantics = [#tpu.dimension_semantics<parallel>, #tpu.dimension_semantics<arbitrary>], iteration_bounds = array<i64: 1, 1>, scalar_prefetch = 0 : i64, scratch_operands = 1 : i64, tpu.core_type = #tpu.core_type<tc>, window_params = [{transform_indices = @transform_0, window_bounds = array<i64: 8, 8>}, {transform_indices = @transform_1, window_bounds = array<i64: 1, 8, 128>}]} {
    %c0_i32 = arith.constant 0 : i32
    %0 = arith.cmpi eq, %arg1, %c0_i32 : i32
    %1 = arith.extui %0 : i1 to i32
    %c0_i32_0 = arith.constant 0 : i32
    %2 = arith.cmpi ne, %1, %c0_i32_0 : i32
    scf.if %2 {
      %cst_10 = arith.constant 0.000000e+00 : f32
      %23 = vector.broadcast %cst_10 : f32 to vector<4x8xf32>
      %c0_11 = arith.constant 0 : index
      %c0_12 = arith.constant 0 : index
      %24 = vector.load %arg4[%c0_11, %c0_12] : memref<4x8xf32, #tpu.memory_space<vmem>>, vector<4x8xf32>
      tpu.vector_store %arg4[%c0_11, %c0_12], %23 {strides = array<i32>} : memref<4x8xf32, #tpu.memory_space<vmem>>, vector<4x8xf32>,
    } else {
    }
    %c0 = arith.constant 0 : index
    %c0_1 = arith.constant 0 : index
    %3 = vector.load %arg2[%c0, %c0_1] : memref<8x8xf32, #tpu.memory_space<vmem>>, vector<8x8xf32>
    %4 = vector.extract_strided_slice %3 {offsets = [0, 0], sizes = [4, 8], strides = [1, 1]} : vector<8x8xf32> to vector<4x8xf32>
    %5 = vector.extract_strided_slice %3 {offsets = [4, 0], sizes = [4, 8], strides = [1, 1]} : vector<8x8xf32> to vector<4x8xf32>
    %6 = arith.subf %4, %5 : vector<4x8xf32>
    %7 = math.absf %6 : vector<4x8xf32>
    %cst = arith.constant -2.000000e+00 : f32
    %8 = vector.broadcast %cst : f32 to vector<4x8xf32>
    %9 = arith.mulf %8, %7 : vector<4x8xf32>
    %10 = math.exp %9 : vector<4x8xf32>
    %cst_2 = arith.constant 1.000000e+00 : f32
    %11 = vector.broadcast %cst_2 : f32 to vector<4x8xf32>
    %12 = arith.addf %11, %10 : vector<4x8xf32>
    %13 = math.log %12 : vector<4x8xf32>
    %14 = arith.addf %7, %13 : vector<4x8xf32>
    %cst_3 = arith.constant 0.693147182 : f32
    %15 = vector.broadcast %cst_3 : f32 to vector<4x8xf32>
    %16 = arith.subf %14, %15 : vector<4x8xf32>
    %c0_4 = arith.constant 0 : index
    %c0_5 = arith.constant 0 : index
    %17 = vector.load %arg4[%c0_4, %c0_5] : memref<4x8xf32, #tpu.memory_space<vmem>>, vector<4x8xf32>
    %18 = arith.addf %17, %16 : vector<4x8xf32>
    %c0_6 = arith.constant 0 : index
    %c0_7 = arith.constant 0 : index
    %19 = vector.load %arg4[%c0_6, %c0_7] : memref<4x8xf32, #tpu.memory_space<vmem>>, vector<4x8xf32>
    tpu.vector_store %arg4[%c0_6, %c0_7], %18 {strides = array<i32>} : memref<4x8xf32, #tpu.memory_space<vmem>>, vector<4x8xf32>,
    %c0_i32_8 = arith.constant 0 : i32
    %20 = arith.cmpi eq, %arg1, %c0_i32_8 : i32
    %21 = arith.extui %20 : i1 to i32
    %c0_i32_9 = arith.constant 0 : i32
    %22 = arith.cmpi ne, %21, %c0_i32_9 : i32
    scf.if %22 {
      %c0_10 = arith.constant 0 : index
      %c0_11 = arith.constant 0 : index
      %23 = vector.load %arg4[%c0_10, %c0_11] : memref<4x8xf32, #tpu.memory_space<vmem>>, vector<4x8xf32>
      %cst_12 = arith.constant dense<0.000000e+00> : vector<4xf32>
      %24 = vector.multi_reduction <add>, %23, %cst_12 [1] : vector<4x8xf32> to vector<4xf32>
      %25 = vector.shape_cast %24 : vector<4xf32> to vector<4x1xf32>
      %26 = tpu.iota {dimensions = array<i32: 0>} : vector<4x1xi32>
      %c2_i32 = arith.constant 2 : i32
      %27 = vector.broadcast %c2_i32 : i32 to vector<4x1xi32>
      %28 = arith.cmpi slt, %26, %27 : vector<4x1xi32>
      %cst_13 = arith.constant 1.000000e+00 : f32
      %cst_14 = arith.constant 2.000000e-01 : f32
      %29 = vector.broadcast %cst_13 : f32 to vector<4x1xf32>
      %30 = vector.broadcast %cst_14 : f32 to vector<4x1xf32>
      %31 = arith.select %28, %29, %30 : vector<4x1xi1>, vector<4x1xf32>
      %32 = arith.mulf %25, %31 : vector<4x1xf32>
      %33 = vector.shape_cast %32 : vector<4x1xf32> to vector<1x4x1xf32>
      %cst_15 = arith.constant dense<0.000000e+00> : vector<1xf32>
      %34 = vector.multi_reduction <add>, %33, %cst_15 [1, 2] : vector<1x4x1xf32> to vector<1xf32>
      %35 = vector.shape_cast %34 : vector<1xf32> to vector<1x1x1xf32>
      %36 = vector.extract %35[0, 0, 0] : f32 from vector<1x1x1xf32>
      %37 = vector.broadcast %36 : f32 to vector<1x8x128xf32>
      %c0_16 = arith.constant 0 : index
      %c0_17 = arith.constant 0 : index
      %c0_18 = arith.constant 0 : index
      %38 = vector.load %arg3[%c0_16, %c0_17, %c0_18] : memref<1x8x128xf32, #tpu.memory_space<vmem>>, vector<1x8x128xf32>
      tpu.vector_store %arg3[%c0_16, %c0_17, %c0_18], %37 {strides = array<i32>} : memref<1x8x128xf32, #tpu.memory_space<vmem>>, vector<1x8x128xf32>,
    } else {
    }
    return
  }
  func.func @transform_0(%arg0: i32, %arg1: i32) -> (i32, i32) {
    %c1_i32 = arith.constant 1 : i32
    %0 = arith.muli %arg0, %c1_i32 : i32
    %1 = arith.addi %0, %arg1 : i32
    %c0_i32 = arith.constant 0 : i32
    %c0_i32_0 = arith.constant 0 : i32
    return %c0_i32, %1 : i32, i32
  }
  func.func @transform_1(%arg0: i32, %arg1: i32) -> (i32, i32, i32) {
    %c0_i32 = arith.constant 0 : i32
    %c0_i32_0 = arith.constant 0 : i32
    %c0_i32_1 = arith.constant 0 : i32
    return %arg0, %c0_i32, %c0_i32_0 : i32, i32, i32
  }
}

</mosaic_0001>

<llo_original>
// kernel: logcosh_loss.1
$region0: #{logcosh_loss.1}
  #allocation0 [shape = 'u32[]', space=smem, size = 0x4, offset = 0x4, fixed_abs, tag = 'smem constant byte address 0x4 - core index']
  #allocation1 [shape = 'u32[144,128]{1,0:T(1,128)}', space=vmem, size = 0x12000, scoped, tag = 'internal scratch']
  #allocation2 [shape = 'f32[4,8]{1,0:T(4,128)}', space=vmem, size = 0x800, scoped, tag = 'scratch operand']
  %s0 = inlined_call_operand.vmem [shape: f32[8,8], index: 0, kind: input, shape index: {}]
  %s1 = inlined_call_operand.vmem [shape: f32[1,8,128], index: 1, kind: output, shape index: {}]
  %s2 = sld [smem:[#allocation0]]
  $region22: #{logcosh_loss.1} parent=0
    _
  %s4 = ssub.s32 1, %s2
  %s5 = scalar_select 0, %s4, %s2
  // Predicated region
  $region2: #{logcosh_loss.1} parent=0 // pred_check
    _
  $region3: #{logcosh_loss.1} parent=0 // pred_check_branch
    %7 = sbr.rel (0) target = $region5
  $region4: #{logcosh_loss.1} parent=0 // pred_region
    %s8 = sadd.s32 0, 0
    %p9 = scmp.lt.s32.totalorder %s8, 0
    %s10 = scalar_select %p9, %s8, 0
    %s11 = smul.addr %s10, 8
    %s12 = scalar_lea.vmem %s0, %s11
    %s13 = sadd.s32 0, 0
  $region5: #{logcosh_loss.1} parent=0 // pred_fallthru
    _
  %s14 = sadd.s32 0, 0
  %p15 = scmp.lt.s32.totalorder %s14, 0
  %s16 = scalar_select %p15, %s14, 0
  %s17 = smul.addr %s16, 8
  %s18 = scalar_lea.vmem %s0, %s17
  %s19 = sadd.s32 0, 0
  %p20 = scmp.lt.s32.totalorder %s19, 0
  %s21 = scalar_select %p20, %s19, 0
  %s22 = smul.addr %s21, 8
  %s23 = scalar_lea.vmem %s0, %s22
  %s24 = sadd.s32 0, 0
  %p25 = scmp.eq.s32.totalorder 0, 0
  // Predicated region
  $region6: #{logcosh_loss.1} parent=0 // pred_check
    %p26 = pneg %p25
  $region7: #{logcosh_loss.1} parent=0 // pred_check_branch
    %28 = sbr.rel (%p26) target = $region9
  $region8: #{logcosh_loss.1} parent=0 // pred_region
    %vm29 = vcmask 60416
    %30 = vst.msk [vmem:[#allocation2] sm:$0xf] %vm29, 0.0
  $region9: #{logcosh_loss.1} parent=0 // pred_fallthru
    _
  %v31 = vld [vmem:[%s23] sm:$0xff]
  %v33 = vrot.slane %v31, 4
  %v35 = vsub.f32 %v31, %v33
  %v36 = vand.u32 2147483647, %v35
  %v37 = vmul.f32 %v36, -2.0
  %v38 = vmul.f32 %v37, 1.442695
  %v39 = vpow.pop %v38
  %v40 = vadd.f32 %v39, 1.0
  %v41 = vlog2.pop %v40
  %v42 = vmul.f32 %v41, 0.6931472
  %v43 = vadd.f32 %v36, %v42
  %v44 = vsub.f32 %v43, 0.6931472
  %v45 = vld [vmem:[#allocation2] sm:$0xf]
  %v46 = vadd.f32 %v45, %v44
  %vm47 = vcmask 60416
  %48 = vst.msk [vmem:[#allocation2] sm:$0xf] %vm47, %v46
  // Predicated region
  $region10: #{logcosh_loss.1} parent=0 // pred_check
    %p49 = pneg %p25
  $region11: #{logcosh_loss.1} parent=0 // pred_check_branch
    %51 = sbr.rel (%p49) target = $region13
  $region12: #{logcosh_loss.1} parent=0 // pred_region
    %v52 = vld [vmem:[#allocation2] sm:$0xf]
    %v53 = vsel %vm47, %v52, 0.0
    %54 = vadd.xlane.f32.xlu0 %v53
    %v55 = vpop.xlane.xlu0 %54
    %v56 = vlaneseq
    %v57 = vshrl.u32 %v56, 7
    %vm58 = vcmp.lt.s32.totalorder %v57, 2
    %v59 = vsel %vm58, 1.0, 0.2
    %v60 = vmul.f32 %v55, %v59
    %vm61 = vcmask 3072
    %v62 = vsel %vm61, %v60, 0.0
    %63 = vadd.xlane.f32.xlu0 %v62
    %v64 = vpop.xlane.xlu0 %63
    %v65 = vrot.slane %v64, 4
    %v66 = vadd.f32 %v64, %v65
    %v67 = vrot.slane %v66, 2
    %v68 = vadd.f32 %v66, %v67
    %v69 = vrot.slane %v68, 1
    %v70 = vadd.f32 %v68, %v69
    %s71 = vtos %v70
    %v72 = vstv %s71
    %73 = vst [vmem:[%s1] sm:$0xff] %v72
  $region13: #{logcosh_loss.1} parent=0 // pred_fallthru
    _
  // Predicated region
  $region14: #{logcosh_loss.1} parent=0 // pred_check
    _
  $region15: #{logcosh_loss.1} parent=0 // pred_check_branch
    %75 = sbr.rel (0) target = $region17
  $region16: #{logcosh_loss.1} parent=0 // pred_region
    _
  $region17: #{logcosh_loss.1} parent=0 // pred_fallthru
    _
  // Predicated region
  $region18: #{logcosh_loss.1} parent=0 // pred_check
    _
  $region19: #{logcosh_loss.1} parent=0 // pred_check_branch
    %77 = sbr.rel (0) target = $region21
  $region20: #{logcosh_loss.1} parent=0 // pred_region
    _
  $region21: #{logcosh_loss.1} parent=0 // pred_fallthru
    _

</llo_original>
